<compile_context>
chip_gen: v6e
topology: v6e:2x2x1
jax: 0.10.0
libtpu: 0.0.40
codegen_flags: <defaults>
</compile_context>

<pallas_src>
import functools

import jax
import jax.numpy as jnp
from jax import lax
from jax.experimental import pallas as pl
from jax.experimental.pallas import tpu as pltpu


def _round_up(x, m):
    return ((x + m - 1) // m) * m


# ----------------------------- Pallas kernel -------------------------------
def gcn_reg_kernel(h_ref, w_ref, adj_ref, out_ref,
                   x0_ref, xa_ref, xb_ref, colsq_ref,
                   *, alpha1, alpha2, alpha3, k, concat, tn, f_out):
    """Grid = (k+1, N_pad // tn).

    ki == 0     : Wh = h @ W  -> x0 / xa scratch; accumulate colsq = sum(Wh^2, 0)
    ki == 1..k  : x <- x0 + x - A x - (C x) D, one row tile at a time,
                  ping-ponging x between xa (odd source) and xb (even source).
    """
    ki = pl.program_id(0)                 # regularization phase (0 = setup)
    ti = pl.program_id(1)                 # row tile index
    row0 = pl.multiple_of(ti * tn, tn)    # first row of this tile (mult. of 8)

    # -------- phase 0: Wh and global column norms ---------------------------
    @pl.when(ki == 0)
    def _setup():
        wh = jnp.dot(h_ref[...], w_ref[...],
                     preferred_element_type=jnp.float32)        # (tn, F_pad)
        x0_ref[pl.ds(row0, tn), :] = wh
        xa_ref[pl.ds(row0, tn), :] = wh
        csq = jnp.sum(wh * wh, axis=0, keepdims=True)           # (1, F_pad)

        @pl.when(ti == 0)
        def _():
            colsq_ref[...] = csq

        @pl.when(ti > 0)
        def _():
            colsq_ref[...] = colsq_ref[...] + csq

        if k == 0:                        # degenerate case: no reg iterations
            out = wh
            if concat:
                out = jnp.where(out > 0, out, jnp.exp(out) - 1.0)
            out_ref[...] = out

    # -------- phases 1..k: x = x0 + x - A x - (C x) D ------------------------
    def reg_iter(xsrc_ref, xdst_ref):
        adjf = adj_ref[...].astype(jnp.float32)                 # (tn, N_pad), 0/1 exact
        row_sum = jnp.sum(adjf, axis=1, keepdims=True) + 1.0    # sum(adj_tilda, 1)
        x_full = xsrc_ref[...]                                  # (N_pad, F_pad)
        x_tile = xsrc_ref[pl.ds(row0, tn), :]                   # (tn, F_pad)
        x0_t = x0_ref[pl.ds(row0, tn), :]

        # A @ x with A = (a1+a2) I - a2/row_sum * (adj + I)   (A never built)
        adj_x = jnp.dot(adjf, x_full, preferred_element_type=jnp.float32)
        ax = (alpha1 + alpha2) * x_tile - (alpha2 / row_sum) * (adj_x + x_tile)

        # (C x) @ D with C = -a3 diag(1/(row_sum+eps)),
        # D = (1 - 1/F) * outer(col_norm, col_norm)           (C, D never built)
        col_norm = jnp.sqrt(colsq_ref[...])                     # (1, F_pad)
        c_diag = -alpha3 / (row_sum + 1e-6)                     # (tn, 1)
        proj = jnp.sum((c_diag * x_tile) * col_norm, axis=1, keepdims=True)
        cxd = (1.0 - 1.0 / f_out) * proj * col_norm             # (tn, F_pad)

        x_new = x0_t + x_tile - ax - cxd
        # Dead on the final iteration; a single VMEM store is cheaper than
        # the control flow to skip it.
        xdst_ref[pl.ds(row0, tn), :] = x_new

        @pl.when(ki == k)                 # final iteration: activation + output
        def _():
            out = x_new
            if concat:
                # ELU, alpha=1 (F.elu default).
                out = jnp.where(out > 0, out, jnp.exp(out) - 1.0)
            out_ref[...] = out

    parity = ki % 2

    @pl.when(jnp.logical_and(ki >= 1, parity == 1))
    def _():
        reg_iter(xa_ref, xb_ref)          # odd iterations: read xa, write xb

    @pl.when(jnp.logical_and(ki >= 1, parity == 0))
    def _():
        reg_iter(xb_ref, xa_ref)          # even iterations: read xb, write xa


# ------------------------------- wrapper ------------------------------------
def gcn_with_reg_forward(h, W, adj, *, alpha1=0.0, alpha2=1.0, alpha3=0.0,
                         k=1, concat=True, block_rows=256):
    N, f_in = h.shape
    f_out = W.shape[1]
    k = int(k)

    # Row tile (multiple of 8) and padded sizes.  F_out is padded to a
    # multiple of 128 for lane-dense output stores; N is padded to a multiple
    # of the row tile (padded rows/cols are inert: Wh rows are zero, adj
    # rows/cols are zero, row_sum gets the +1 self loop, so they stay zero).
    tn = min(int(block_rows), _round_up(N, 8))
    tn = max(8, (tn // 8) * 8)
    n_pad = _round_up(N, tn)
    f_pad = _round_up(max(f_out, 1), 128)
    n_tiles = n_pad // tn

    h_p = jnp.pad(h.astype(jnp.float32), ((0, n_pad - N), (0, 0)))
    w_p = jnp.pad(W.astype(jnp.float32), ((0, 0), (0, f_pad - f_out)))
    # adj is 0/1 -> exact in bf16; halves HBM traffic of the dominant operand.
    adj_p = jnp.pad(adj.astype(jnp.float32),
                    ((0, n_pad - N), (0, n_pad - N))).astype(jnp.bfloat16)

    kernel = functools.partial(
        gcn_reg_kernel, alpha1=float(alpha1), alpha2=float(alpha2),
        alpha3=float(alpha3), k=k, concat=bool(concat), tn=tn,
        f_out=float(f_out))

    # --- conditional index maps: only DMA a block when the phase uses it ----
    # h rows are only read in phase ki==0; park the index afterwards so no
    # refetch ever happens.
    def h_map(ki, ti):
        return (lax.select(ki == 0, ti, n_tiles - 1), 0)

    # adj rows are only read in phases ki>=1; during ki==0 stay on block 0
    # (which is then reused, not refetched, at the first real iteration).
    def adj_map(ki, ti):
        return (lax.select(ki == 0, 0, ti), 0)

    # the output is only written at ki==k; keep the block index constant
    # before that so stale blocks are never flushed to HBM.
    def out_map(ki, ti):
        return (lax.select(ki == k, ti, 0), 0)

    # VMEM budget: resident scratch + double-buffered streamed blocks.
    resident = (3 * n_pad * f_pad + f_pad) * 4
    streamed = 2 * (tn * f_in * 4 + f_in * f_pad * 4
                    + tn * n_pad * 2 + tn * f_pad * 4)
    vmem_limit = int(min(128 * 1024 * 1024,
                         max(32 * 1024 * 1024, int((resident + streamed) * 1.25))))

    out = pl.pallas_call(
        kernel,
        out_shape=jax.ShapeDtypeStruct((n_pad, f_pad), jnp.float32),
        grid_spec=pltpu.PrefetchScalarGridSpec(
            num_scalar_prefetch=0,
            grid=(k + 1, n_tiles),
            in_specs=[
                pl.BlockSpec((tn, f_in), h_map),        # h rows   (f32)
                pl.BlockSpec((f_in, f_pad), lambda ki, ti: (0, 0)),  # W resident
                pl.BlockSpec((tn, n_pad), adj_map),     # adj rows (bf16)
            ],
            out_specs=pl.BlockSpec((tn, f_pad), out_map),
            scratch_shapes=[
                pltpu.VMEM((n_pad, f_pad), jnp.float32),   # x0 = Wh (resident)
                pltpu.VMEM((n_pad, f_pad), jnp.float32),   # x ping
                pltpu.VMEM((n_pad, f_pad), jnp.float32),   # x pong
                pltpu.VMEM((1, f_pad), jnp.float32),       # sum(Wh^2, axis=0)
            ]),
        # Both grid axes are "arbitrary": the k axis is a true sequential
        # dependence and the row-tile axis shares the resident x scratch.
        compiler_params=pltpu.CompilerParams(
            dimension_semantics=("arbitrary", "arbitrary"),
            vmem_limit_bytes=vmem_limit),
    )(h_p, w_p, adj_p)

    return out[:N, :f_out]


# --------------------------- pure-JAX reference ------------------------------
def gcn_with_reg_reference(h, W, adj, *, alpha1=0.0, alpha2=1.0, alpha3=0.0,
                           k=1, concat=True):
    Wh = h @ W
    N = adj.shape[0]
    F = Wh.shape[1]
    unit = jnp.eye(N, dtype=jnp.float32)
    adj_t = adj + unit
    A = (alpha1 + alpha2) * unit - alpha2 * (
        1.0 / jnp.sum(adj_t, axis=1, keepdims=True)) * adj_t
    B = jnp.eye(F, dtype=jnp.float32)
    C = -alpha3 * jnp.diag(1.0 / (jnp.sum(adj_t, axis=1) + 1e-6))
    dx_rev = jnp.diag(jnp.sqrt(jnp.sum(Wh * Wh, axis=0)))
    D = dx_rev @ ((1.0 - jnp.ones((F, F), jnp.float32) / F) @ dx_rev)
    x0 = Wh
    x = Wh
    for _ in range(k):
        x = x0 + x - (A @ x) @ B - (C @ x) @ D
    if concat:
        x = jnp.where(x > 0, x, jnp.exp(x) - 1.0)
    return x


# ---------------------------------- main -------------------------------------
if __name__ == "__main__":
    key = jax.random.PRNGKey(0)
    k_h, k_adj, k_w = jax.random.split(key, 3)

    N = 16          # number of nodes
    F_IN = 16       # in_features
    F_OUT = 32      # out_features

    # module hyperparameters (constructor args); dropout / leakyrelu-alpha and
    # the attention parameter `a` are unused in forward() and omitted.
    alpha1, alpha2, alpha3 = 0.1, 1.0, 0.05
    k_iters = 2
    concat = True

    # deterministic xavier_uniform_ init (gain=1.414), as in __init__
    gain = 1.414
    bound_w = gain * (6.0 / (F_IN + F_OUT)) ** 0.5
    W = jax.random.uniform(k_w, (F_IN, F_OUT), jnp.float32, -bound_w, bound_w)

    # inputs
    h = jax.random.normal(k_h, (N, F_IN), jnp.float32)
    adj = (jax.random.uniform(k_adj, (N, N)) > 0.5).astype(jnp.float32)
    adj = jnp.maximum(adj, adj.T)   # symmetric 0/1 adjacency

    # config 1: block_rows=8 -> 2 row tiles, grid (k+1, 2): exercises the
    # tiled path, the ping-pong and the conditional index maps.
    out = gcn_with_reg_forward(h, W, adj, alpha1=alpha1, alpha2=alpha2,
                               alpha3=alpha3, k=k_iters, concat=concat,
                               block_rows=8)
    out = jax.block_until_ready(out)
    ref = gcn_with_reg_reference(h, W, adj, alpha1=alpha1, alpha2=alpha2,
                                 alpha3=alpha3, k=k_iters, concat=concat)
    assert out.shape == (N, F_OUT)
    assert jnp.allclose(out, ref, atol=1e-4, rtol=1e-4), "mismatch vs reference"

    # config 2: single row tile, k=1, concat=False (no ELU).
    out2 = gcn_with_reg_forward(h, W, adj, alpha1=alpha1, alpha2=alpha2,
                                alpha3=0.0, k=1, concat=False,
                                block_rows=256)
    out2 = jax.block_until_ready(out2)
    ref2 = gcn_with_reg_reference(h, W, adj, alpha1=alpha1, alpha2=alpha2,
                                  alpha3=0.0, k=1, concat=False)
    assert jnp.allclose(out2, ref2, atol=1e-4, rtol=1e-4), "mismatch (cfg2)"

    print("KERNEL_OK")
</pallas_src>

<mosaic_0001>
module attributes {stable_mosaic.version = 11 : i64} {
  func.func @gcn_reg_kernel(%arg0: i32, %arg1: i32, %arg2: memref<8x16xf32, #tpu.memory_space<vmem>>, %arg3: memref<16x128xf32, #tpu.memory_space<vmem>>, %arg4: memref<8x16xbf16, #tpu.memory_space<vmem>>, %arg5: memref<8x128xf32, #tpu.memory_space<vmem>>, %arg6: memref<16x128xf32, #tpu.memory_space<vmem>>, %arg7: memref<16x128xf32, #tpu.memory_space<vmem>>, %arg8: memref<16x128xf32, #tpu.memory_space<vmem>>, %arg9: memref<1x128xf32, #tpu.memory_space<vmem>>) attributes {dimension_semantics = [#tpu.dimension_semantics<arbitrary>, #tpu.dimension_semantics<arbitrary>], iteration_bounds = array<i64: 3, 2>, scalar_prefetch = 0 : i64, scratch_operands = 4 : i64, tpu.core_type = #tpu.core_type<tc>, window_params = [{transform_indices = @transform_0, window_bounds = array<i64: 8, 16>}, {pipeline_mode = #tpu.pipeline_mode<synchronous>, transform_indices = @transform_1, window_bounds = array<i64: 16, 128>}, {transform_indices = @transform_2, window_bounds = array<i64: 8, 16>}, {transform_indices = @transform_3, window_bounds = array<i64: 8, 128>}]} {
    %c8_i32 = arith.constant 8 : i32
    %0 = arith.muli %arg1, %c8_i32 : i32
    %1 = tpu.assume_multiple %0, 8 : i32
    %c0_i32 = arith.constant 0 : i32
    %2 = arith.cmpi eq, %arg0, %c0_i32 : i32
    %3 = arith.extui %2 : i1 to i32
    %c0_i32_0 = arith.constant 0 : i32
    %4 = arith.cmpi ne, %3, %c0_i32_0 : i32
    scf.if %4 {
      %c0 = arith.constant 0 : index
      %c0_11 = arith.constant 0 : index
      %25 = vector.load %arg2[%c0, %c0_11] : memref<8x16xf32, #tpu.memory_space<vmem>>, vector<8x16xf32>
      %c0_12 = arith.constant 0 : index
      %c0_13 = arith.constant 0 : index
      %26 = vector.load %arg3[%c0_12, %c0_13] : memref<16x128xf32, #tpu.memory_space<vmem>>, vector<16x128xf32>
      %cst = arith.constant dense<0.000000e+00> : vector<8x128xf32>
      %27 = tpu.matmul %25, %26, %cst {dimension_numbers = #tpu.dot_dimension_numbers<[1], [0], [0], [1], [0, 0, 1, 1], [], []>} : vector<8x16xf32>, vector<16x128xf32>, vector<8x128xf32> -> vector<8x128xf32>
      %28 = arith.index_cast %1 : i32 to index
      %c0_14 = arith.constant 0 : index
      %29 = vector.load %arg6[%28, %c0_14] : memref<16x128xf32, #tpu.memory_space<vmem>>, vector<8x128xf32>
      tpu.vector_store %arg6[%28, %c0_14], %27 {strides = array<i32>} : memref<16x128xf32, #tpu.memory_space<vmem>>, vector<8x128xf32>,
      %30 = arith.index_cast %1 : i32 to index
      %c0_15 = arith.constant 0 : index
      %31 = vector.load %arg7[%30, %c0_15] : memref<16x128xf32, #tpu.memory_space<vmem>>, vector<8x128xf32>
      tpu.vector_store %arg7[%30, %c0_15], %27 {strides = array<i32>} : memref<16x128xf32, #tpu.memory_space<vmem>>, vector<8x128xf32>,
      %32 = arith.mulf %27, %27 : vector<8x128xf32>
      %cst_16 = arith.constant dense<0.000000e+00> : vector<128xf32>
      %33 = vector.multi_reduction <add>, %32, %cst_16 [0] : vector<8x128xf32> to vector<128xf32>
      %34 = vector.shape_cast %33 : vector<128xf32> to vector<1x128xf32>
      %c0_i32_17 = arith.constant 0 : i32
      %35 = arith.cmpi eq, %arg1, %c0_i32_17 : i32
      %36 = arith.extui %35 : i1 to i32
      %c0_i32_18 = arith.constant 0 : i32
      %37 = arith.cmpi ne, %36, %c0_i32_18 : i32
      scf.if %37 {
        %c0_21 = arith.constant 0 : index
        %c0_22 = arith.constant 0 : index
        %41 = vector.load %arg9[%c0_21, %c0_22] : memref<1x128xf32, #tpu.memory_space<vmem>>, vector<1x128xf32>
        tpu.vector_store %arg9[%c0_21, %c0_22], %34 {strides = array<i32>} : memref<1x128xf32, #tpu.memory_space<vmem>>, vector<1x128xf32>,
      } else {
      }
      %c0_i32_19 = arith.constant 0 : i32
      %38 = arith.cmpi sgt, %arg1, %c0_i32_19 : i32
      %39 = arith.extui %38 : i1 to i32
      %c0_i32_20 = arith.constant 0 : i32
      %40 = arith.cmpi ne, %39, %c0_i32_20 : i32
      scf.if %40 {
        %c0_21 = arith.constant 0 : index
        %c0_22 = arith.constant 0 : index
        %41 = vector.load %arg9[%c0_21, %c0_22] : memref<1x128xf32, #tpu.memory_space<vmem>>, vector<1x128xf32>
        %42 = arith.addf %41, %34 : vector<1x128xf32>
        %c0_23 = arith.constant 0 : index
        %c0_24 = arith.constant 0 : index
        %43 = vector.load %arg9[%c0_23, %c0_24] : memref<1x128xf32, #tpu.memory_space<vmem>>, vector<1x128xf32>
        tpu.vector_store %arg9[%c0_23, %c0_24], %42 {strides = array<i32>} : memref<1x128xf32, #tpu.memory_space<vmem>>, vector<1x128xf32>,
      } else {
      }
    } else {
    }
    %c2_i32 = arith.constant 2 : i32
    %c0_i32_1 = arith.constant 0 : i32
    %5 = arith.cmpi eq, %c2_i32, %c0_i32_1 : i32
    %c1_i32 = arith.constant 1 : i32
    %6 = arith.select %5, %c1_i32, %c2_i32 : i32
    %7 = arith.remsi %arg0, %6 : i32
    %c0_i32_2 = arith.constant 0 : i32
    %8 = arith.cmpi ne, %7, %c0_i32_2 : i32
    %c0_i32_3 = arith.constant 0 : i32
    %9 = arith.cmpi slt, %7, %c0_i32_3 : i32
    %c0_i32_4 = arith.constant 0 : i32
    %10 = arith.cmpi slt, %6, %c0_i32_4 : i32
    %11 = arith.xori %9, %10 : i1
    %12 = arith.andi %11, %8 : i1
    %13 = arith.addi %7, %6 : i32
    %14 = arith.select %12, %13, %7 : i32
    %c1_i32_5 = arith.constant 1 : i32
    %15 = arith.cmpi sge, %arg0, %c1_i32_5 : i32
    %c1_i32_6 = arith.constant 1 : i32
    %16 = arith.cmpi eq, %14, %c1_i32_6 : i32
    %17 = arith.andi %15, %16 : i1
    %18 = arith.extui %17 : i1 to i32
    %c0_i32_7 = arith.constant 0 : i32
    %19 = arith.cmpi ne, %18, %c0_i32_7 : i32
    scf.if %19 {
      %c0 = arith.constant 0 : index
      %c0_11 = arith.constant 0 : index
      %25 = vector.load %arg4[%c0, %c0_11] : memref<8x16xbf16, #tpu.memory_space<vmem>>, vector<8x16xbf16>
      %26 = arith.extf %25 : vector<8x16xbf16> to vector<8x16xf32>
      %cst = arith.constant dense<0.000000e+00> : vector<8xf32>
      %27 = vector.multi_reduction <add>, %26, %cst [1] : vector<8x16xf32> to vector<8xf32>
      %28 = vector.shape_cast %27 : vector<8xf32> to vector<8x1xf32>
      %cst_12 = arith.constant 1.000000e+00 : f32
      %29 = vector.broadcast %cst_12 : f32 to vector<8x1xf32>
      %30 = arith.addf %28, %29 : vector<8x1xf32>
      %c0_13 = arith.constant 0 : index
      %c0_14 = arith.constant 0 : index
      %31 = vector.load %arg7[%c0_13, %c0_14] : memref<16x128xf32, #tpu.memory_space<vmem>>, vector<16x128xf32>
      %32 = arith.index_cast %1 : i32 to index
      %c0_15 = arith.constant 0 : index
      %33 = vector.load %arg7[%32, %c0_15] : memref<16x128xf32, #tpu.memory_space<vmem>>, vector<8x128xf32>
      %34 = arith.index_cast %1 : i32 to index
      %c0_16 = arith.constant 0 : index
      %35 = vector.load %arg6[%34, %c0_16] : memref<16x128xf32, #tpu.memory_space<vmem>>, vector<8x128xf32>
      %cst_17 = arith.constant dense<0.000000e+00> : vector<8x128xf32>
      %36 = tpu.matmul %26, %31, %cst_17 {dimension_numbers = #tpu.dot_dimension_numbers<[1], [0], [0], [1], [0, 0, 1, 1], [], []>} : vector<8x16xf32>, vector<16x128xf32>, vector<8x128xf32> -> vector<8x128xf32>
      %cst_18 = arith.constant 1.100000e+00 : f32
      %37 = vector.broadcast %cst_18 : f32 to vector<8x128xf32>
      %38 = arith.mulf %37, %33 : vector<8x128xf32>
      %cst_19 = arith.constant 1.000000e+00 : f32
      %39 = vector.broadcast %cst_19 : f32 to vector<8x1xf32>
      %40 = arith.divf %39, %30 : vector<8x1xf32>
      %41 = arith.addf %36, %33 : vector<8x128xf32>
      %42 = vector.broadcast %40 : vector<8x1xf32> to vector<8x128xf32>
      %43 = arith.mulf %42, %41 : vector<8x128xf32>
      %44 = arith.subf %38, %43 : vector<8x128xf32>
      %c0_20 = arith.constant 0 : index
      %c0_21 = arith.constant 0 : index
      %45 = vector.load %arg9[%c0_20, %c0_21] : memref<1x128xf32, #tpu.memory_space<vmem>>, vector<1x128xf32>
      %46 = math.sqrt %45 : vector<1x128xf32>
      %cst_22 = arith.constant 9.99999997E-7 : f32
      %47 = vector.broadcast %cst_22 : f32 to vector<8x1xf32>
      %48 = arith.addf %30, %47 : vector<8x1xf32>
      %cst_23 = arith.constant -5.000000e-02 : f32
      %49 = vector.broadcast %cst_23 : f32 to vector<8x1xf32>
      %50 = arith.divf %49, %48 : vector<8x1xf32>
      %51 = vector.broadcast %50 : vector<8x1xf32> to vector<8x128xf32>
      %52 = arith.mulf %51, %33 : vector<8x128xf32>
      %53 = vector.broadcast %46 : vector<1x128xf32> to vector<8x128xf32>
      %54 = arith.mulf %52, %53 : vector<8x128xf32>
      %cst_24 = arith.constant dense<0.000000e+00> : vector<8xf32>
      %55 = vector.multi_reduction <add>, %54, %cst_24 [1] : vector<8x128xf32> to vector<8xf32>
      %56 = vector.shape_cast %55 : vector<8xf32> to vector<8x1xf32>
      %cst_25 = arith.constant 9.687500e-01 : f32
      %57 = vector.broadcast %cst_25 : f32 to vector<8x1xf32>
      %58 = arith.mulf %57, %56 : vector<8x1xf32>
      %59 = vector.broadcast %58 : vector<8x1xf32> to vector<8x128xf32>
      %60 = vector.broadcast %46 : vector<1x128xf32> to vector<8x128xf32>
      %61 = arith.mulf %59, %60 : vector<8x128xf32>
      %62 = arith.addf %35, %33 : vector<8x128xf32>
      %63 = arith.subf %62, %44 : vector<8x128xf32>
      %64 = arith.subf %63, %61 : vector<8x128xf32>
      %65 = arith.index_cast %1 : i32 to index
      %c0_26 = arith.constant 0 : index
      %66 = vector.load %arg8[%65, %c0_26] : memref<16x128xf32, #tpu.memory_space<vmem>>, vector<8x128xf32>
      tpu.vector_store %arg8[%65, %c0_26], %64 {strides = array<i32>} : memref<16x128xf32, #tpu.memory_space<vmem>>, vector<8x128xf32>,
      %c2_i32_27 = arith.constant 2 : i32
      %67 = arith.cmpi eq, %arg0, %c2_i32_27 : i32
      %68 = arith.extui %67 : i1 to i32
      %c0_i32_28 = arith.constant 0 : i32
      %69 = arith.cmpi ne, %68, %c0_i32_28 : i32
      scf.if %69 {
        %cst_29 = arith.constant 0.000000e+00 : f32
        %70 = vector.broadcast %cst_29 : f32 to vector<8x128xf32>
        %71 = arith.cmpf ogt, %64, %70 : vector<8x128xf32>
        %72 = math.exp %64 : vector<8x128xf32>
        %cst_30 = arith.constant 1.000000e+00 : f32
        %73 = vector.broadcast %cst_30 : f32 to vector<8x128xf32>
        %74 = arith.subf %72, %73 : vector<8x128xf32>
        %75 = arith.select %71, %64, %74 : vector<8x128xi1>, vector<8x128xf32>
        %c0_31 = arith.constant 0 : index
        %c0_32 = arith.constant 0 : index
        %76 = vector.load %arg5[%c0_31, %c0_32] : memref<8x128xf32, #tpu.memory_space<vmem>>, vector<8x128xf32>
        tpu.vector_store %arg5[%c0_31, %c0_32], %75 {strides = array<i32>} : memref<8x128xf32, #tpu.memory_space<vmem>>, vector<8x128xf32>,
      } else {
      }
    } else {
    }
    %c1_i32_8 = arith.constant 1 : i32
    %20 = arith.cmpi sge, %arg0, %c1_i32_8 : i32
    %c0_i32_9 = arith.constant 0 : i32
    %21 = arith.cmpi eq, %14, %c0_i32_9 : i32
    %22 = arith.andi %20, %21 : i1
    %23 = arith.extui %22 : i1 to i32
    %c0_i32_10 = arith.constant 0 : i32
    %24 = arith.cmpi ne, %23, %c0_i32_10 : i32
    scf.if %24 {
      %c0 = arith.constant 0 : index
      %c0_11 = arith.constant 0 : index
      %25 = vector.load %arg4[%c0, %c0_11] : memref<8x16xbf16, #tpu.memory_space<vmem>>, vector<8x16xbf16>
      %26 = arith.extf %25 : vector<8x16xbf16> to vector<8x16xf32>
      %cst = arith.constant dense<0.000000e+00> : vector<8xf32>
      %27 = vector.multi_reduction <add>, %26, %cst [1] : vector<8x16xf32> to vector<8xf32>
      %28 = vector.shape_cast %27 : vector<8xf32> to vector<8x1xf32>
      %cst_12 = arith.constant 1.000000e+00 : f32
      %29 = vector.broadcast %cst_12 : f32 to vector<8x1xf32>
      %30 = arith.addf %28, %29 : vector<8x1xf32>
      %c0_13 = arith.constant 0 : index
      %c0_14 = arith.constant 0 : index
      %31 = vector.load %arg8[%c0_13, %c0_14] : memref<16x128xf32, #tpu.memory_space<vmem>>, vector<16x128xf32>
      %32 = arith.index_cast %1 : i32 to index
      %c0_15 = arith.constant 0 : index
      %33 = vector.load %arg8[%32, %c0_15] : memref<16x128xf32, #tpu.memory_space<vmem>>, vector<8x128xf32>
      %34 = arith.index_cast %1 : i32 to index
      %c0_16 = arith.constant 0 : index
      %35 = vector.load %arg6[%34, %c0_16] : memref<16x128xf32, #tpu.memory_space<vmem>>, vector<8x128xf32>
      %cst_17 = arith.constant dense<0.000000e+00> : vector<8x128xf32>
      %36 = tpu.matmul %26, %31, %cst_17 {dimension_numbers = #tpu.dot_dimension_numbers<[1], [0], [0], [1], [0, 0, 1, 1], [], []>} : vector<8x16xf32>, vector<16x128xf32>, vector<8x128xf32> -> vector<8x128xf32>
      %cst_18 = arith.constant 1.100000e+00 : f32
      %37 = vector.broadcast %cst_18 : f32 to vector<8x128xf32>
      %38 = arith.mulf %37, %33 : vector<8x128xf32>
      %cst_19 = arith.constant 1.000000e+00 : f32
      %39 = vector.broadcast %cst_19 : f32 to vector<8x1xf32>
      %40 = arith.divf %39, %30 : vector<8x1xf32>
      %41 = arith.addf %36, %33 : vector<8x128xf32>
      %42 = vector.broadcast %40 : vector<8x1xf32> to vector<8x128xf32>
      %43 = arith.mulf %42, %41 : vector<8x128xf32>
      %44 = arith.subf %38, %43 : vector<8x128xf32>
      %c0_20 = arith.constant 0 : index
      %c0_21 = arith.constant 0 : index
      %45 = vector.load %arg9[%c0_20, %c0_21] : memref<1x128xf32, #tpu.memory_space<vmem>>, vector<1x128xf32>
      %46 = math.sqrt %45 : vector<1x128xf32>
      %cst_22 = arith.constant 9.99999997E-7 : f32
      %47 = vector.broadcast %cst_22 : f32 to vector<8x1xf32>
      %48 = arith.addf %30, %47 : vector<8x1xf32>
      %cst_23 = arith.constant -5.000000e-02 : f32
      %49 = vector.broadcast %cst_23 : f32 to vector<8x1xf32>
      %50 = arith.divf %49, %48 : vector<8x1xf32>
      %51 = vector.broadcast %50 : vector<8x1xf32> to vector<8x128xf32>
      %52 = arith.mulf %51, %33 : vector<8x128xf32>
      %53 = vector.broadcast %46 : vector<1x128xf32> to vector<8x128xf32>
      %54 = arith.mulf %52, %53 : vector<8x128xf32>
      %cst_24 = arith.constant dense<0.000000e+00> : vector<8xf32>
      %55 = vector.multi_reduction <add>, %54, %cst_24 [1] : vector<8x128xf32> to vector<8xf32>
      %56 = vector.shape_cast %55 : vector<8xf32> to vector<8x1xf32>
      %cst_25 = arith.constant 9.687500e-01 : f32
      %57 = vector.broadcast %cst_25 : f32 to vector<8x1xf32>
      %58 = arith.mulf %57, %56 : vector<8x1xf32>
      %59 = vector.broadcast %58 : vector<8x1xf32> to vector<8x128xf32>
      %60 = vector.broadcast %46 : vector<1x128xf32> to vector<8x128xf32>
      %61 = arith.mulf %59, %60 : vector<8x128xf32>
      %62 = arith.addf %35, %33 : vector<8x128xf32>
      %63 = arith.subf %62, %44 : vector<8x128xf32>
      %64 = arith.subf %63, %61 : vector<8x128xf32>
      %65 = arith.index_cast %1 : i32 to index
      %c0_26 = arith.constant 0 : index
      %66 = vector.load %arg7[%65, %c0_26] : memref<16x128xf32, #tpu.memory_space<vmem>>, vector<8x128xf32>
      tpu.vector_store %arg7[%65, %c0_26], %64 {strides = array<i32>} : memref<16x128xf32, #tpu.memory_space<vmem>>, vector<8x128xf32>,
      %c2_i32_27 = arith.constant 2 : i32
      %67 = arith.cmpi eq, %arg0, %c2_i32_27 : i32
      %68 = arith.extui %67 : i1 to i32
      %c0_i32_28 = arith.constant 0 : i32
      %69 = arith.cmpi ne, %68, %c0_i32_28 : i32
      scf.if %69 {
        %cst_29 = arith.constant 0.000000e+00 : f32
        %70 = vector.broadcast %cst_29 : f32 to vector<8x128xf32>
        %71 = arith.cmpf ogt, %64, %70 : vector<8x128xf32>
        %72 = math.exp %64 : vector<8x128xf32>
        %cst_30 = arith.constant 1.000000e+00 : f32
        %73 = vector.broadcast %cst_30 : f32 to vector<8x128xf32>
        %74 = arith.subf %72, %73 : vector<8x128xf32>
        %75 = arith.select %71, %64, %74 : vector<8x128xi1>, vector<8x128xf32>
        %c0_31 = arith.constant 0 : index
        %c0_32 = arith.constant 0 : index
        %76 = vector.load %arg5[%c0_31, %c0_32] : memref<8x128xf32, #tpu.memory_space<vmem>>, vector<8x128xf32>
        tpu.vector_store %arg5[%c0_31, %c0_32], %75 {strides = array<i32>} : memref<8x128xf32, #tpu.memory_space<vmem>>, vector<8x128xf32>,
      } else {
      }
    } else {
    }
    return
  }
  func.func @transform_0(%arg0: i32, %arg1: i32) -> (i32, i32) {
    %c0_i32 = arith.constant 0 : i32
    %0 = arith.cmpi eq, %arg0, %c0_i32 : i32
    %c1_i32 = arith.constant 1 : i32
    %1 = arith.select %0, %arg1, %c1_i32 : i32
    %c0_i32_0 = arith.constant 0 : i32
    %c0_i32_1 = arith.constant 0 : i32
    return %1, %c0_i32_0 : i32, i32
  }
  func.func @transform_1(%arg0: i32, %arg1: i32) -> (i32, i32) {
    %c0_i32 = arith.constant 0 : i32
    %c0_i32_0 = arith.constant 0 : i32
    %c0_i32_1 = arith.constant 0 : i32
    return %c0_i32, %c0_i32_0 : i32, i32
  }
  func.func @transform_2(%arg0: i32, %arg1: i32) -> (i32, i32) {
    %c0_i32 = arith.constant 0 : i32
    %0 = arith.cmpi eq, %arg0, %c0_i32 : i32
    %c0_i32_0 = arith.constant 0 : i32
    %1 = arith.select %0, %c0_i32_0, %arg1 : i32
    %c0_i32_1 = arith.constant 0 : i32
    %c0_i32_2 = arith.constant 0 : i32
    return %1, %c0_i32_1 : i32, i32
  }
  func.func @transform_3(%arg0: i32, %arg1: i32) -> (i32, i32) {
    %c2_i32 = arith.constant 2 : i32
    %0 = arith.cmpi eq, %arg0, %c2_i32 : i32
    %c0_i32 = arith.constant 0 : i32
    %1 = arith.select %0, %arg1, %c0_i32 : i32
    %c0_i32_0 = arith.constant 0 : i32
    %c0_i32_1 = arith.constant 0 : i32
    return %1, %c0_i32_0 : i32, i32
  }
}

</mosaic_0001>

<llo_original>
// kernel: tpu_custom_call.1
$region0: #{tpu_custom_call.1}
  #allocation0 [shape = 'u32[]', space=smem, size = 0x4, offset = 0x4, fixed_abs, tag = 'smem constant byte address 0x4 - core index']
  #allocation1 [shape = 'u32[144,128]{1,0:T(1,128)}', space=vmem, size = 0x12000, scoped, tag = 'internal scratch']
  #allocation2 [shape = 'f32[16,128]{1,0:T(8,128)}', space=vmem, size = 0x2000, scoped, tag = 'scratch operand']
  #allocation3 [shape = 'f32[16,128]{1,0:T(8,128)}', space=vmem, size = 0x2000, scoped, tag = 'scratch operand']
  #allocation4 [shape = 'f32[16,128]{1,0:T(8,128)}', space=vmem, size = 0x2000, scoped, tag = 'scratch operand']
  #allocation5 [shape = 'f32[1,128]{1,0:T(1,128)}', space=vmem, size = 0x200, scoped, tag = 'scratch operand']
  %s0 = inlined_call_operand.hbm [shape: f32[16,16], index: 0, kind: input, shape index: {}]
  %s1 = inlined_call_operand.hbm [shape: f32[16,128], index: 1, kind: input, shape index: {}]
  %s2 = inlined_call_operand.hbm [shape: bf16[16,16], index: 2, kind: input, shape index: {}]
  %s3 = inlined_call_operand.hbm [shape: f32[16,128], index: 3, kind: output, shape index: {}]
  %s4 = sld [smem:[#allocation0]]
  $region85: #{tpu_custom_call.1} parent=0
    _
  %s6 = ssub.s32 1, %s4
  %s7 = scalar_select 0, %s6, %s4
  $region1: #{tpu_custom_call.1} parent=0
    #allocation6 [shape = 'u8[8192]{0}', space=vmem, size = 0x2000, scoped, tag = 'input window, operand 0']
    #allocation7 [shape = 's32[2]{0}', space=sflag, size = 0x8, scoped, tag = 'scoped memory for tpu_custom_call.1']
    #allocation8 [shape = 's32[2]{0}', space=sflag, size = 0x8, scoped, tag = 'scoped memory for tpu_custom_call.1']
    #allocation9 [shape = 'u8[8192]{0}', space=vmem, size = 0x2000, scoped, tag = 'input window, operand 1, single buffered']
    #allocation10 [shape = 's32[1]{0}', space=sflag, size = 0x4, scoped, tag = 'scoped memory for tpu_custom_call.1']
    #allocation11 [shape = 'u8[4096]{0}', space=vmem, size = 0x1000, scoped, tag = 'input window, operand 2']
    #allocation12 [shape = 'u8[8192]{0}', space=vmem, size = 0x2000, scoped, tag = 'output window, operand 0']
    %8 = vsyncpa [#allocation7], 0
    %s9 = scalar_lea.sflag [#allocation7], 1
    %10 = vsyncpa %s9, 0
    %11 = vsyncpa [#allocation10], 0
    %12 = vsyncpa [#allocation8], 0
    %s13 = scalar_lea.sflag [#allocation8], 1
    %14 = vsyncpa %s13, 0
    loop: start=0, step=1, limit=8
    $region2: #{tpu_custom_call.1} parent=1 // loop_pre_header
      _
    $region3: #{tpu_custom_call.1} parent=1 // loop_header
      %s16 = sphi 0, %s20
      %p17 = scmp.ge.s32.totalorder %s16, 8
      %s23 = sphi 0, %s35
      %s24 = sphi 0, %s31
      %s25 = sphi 0, %s23
      %s26 = sphi 0, %s24
      %s27 = sphi 0, %s25
      %s28 = sphi 0, %s26
      %s42 = sphi 0, %s44
      %s45 = sphi 0, %s42
      %s46 = sphi 0, %s45
      %s62 = sphi 0, %s46
      %s66 = sphi 0, %s66
      %s68 = sphi 0, %s66
      %s69 = sphi 0, %s68
      %s83 = sphi 0, %s69
      %s93 = sphi 0, %s95
      %s96 = sphi 0, %s93
      %s97 = sphi 0, %s96
      %s113 = sphi 0, %s97
      %s123 = sphi 0, %s125
      %s126 = sphi 0, %s123
      %s127 = sphi 0, %s126
      %s143 = sphi 0, %s127
    $region4: #{tpu_custom_call.1} parent=1 // loop_header_branch
      %19 = sbr.rel (%p17) target = $region8
    $region5: #{tpu_custom_call.1} parent=1 // loop_body
      %s21 = ssub.s32 %s16, 1
      %s22 = ssub.s32 %s16, 2
      %s29 = sadd.s32 1, %s24
      %p30 = scmp.ge.s32.totalorder %s29, 2
      %s31 = scalar_select %p30, 0, %s29
      %s32 = sadd.s32 1, %s23
      %s33 = scalar_select %p30, %s32, %s23
      %p34 = scmp.ge.s32.totalorder %s33, 3
      %s35 = scalar_select %p34, 0, %s33
      %p36 = scmp.eq.s32.totalorder %s23, 0
      %s37 = scalar_select %p36, %s24, 1
      %p38 = scmp.eq.s32.totalorder %s35, 0
      %s39 = scalar_select %p38, %s31, 1
      %s40 = ssub.s32 %s37, %s39
      %p41 = scmp.eq.s32.totalorder %s40, 0
      %s43 = sadd.s32 %s42, 1
      %s44 = scalar_select %p41, %s42, %s43
      %p47 = pneg %p41
      %p48 = scmp.eq.s32.totalorder %s16, 5
      %p49 = por %p47, %p48
      %p50 = scmp.ne.s32.totalorder %s42, %s45
      %p51 = scmp.eq.s32.totalorder %s16, 0
      %p52 = por %p50, %p51
      %p53 = scmp.ne.s32.totalorder %s42, %s45
      %p54 = scmp.eq.s32.totalorder %s21, 5
      %p55 = por %p53, %p54
      %p56 = scmp.ne.s32.totalorder %s45, %s46
      %p57 = scmp.eq.s32.totalorder %s21, 0
      %p58 = por %p56, %p57
      %p59 = scmp.ne.s32.totalorder %s45, %s46
      %p60 = scmp.eq.s32.totalorder %s22, 5
      %p61 = por %p59, %p60
      %p63 = scmp.ne.s32.totalorder %s46, %s62
      %p64 = scmp.eq.s32.totalorder %s22, 0
      %p65 = por %p63, %p64
      %s67 = sadd.s32 %s66, 1
      %p70 = scmp.eq.s32.totalorder %s16, 5
      %p71 = scmp.ne.s32.totalorder %s66, %s68
      %p72 = scmp.eq.s32.totalorder %s16, 0
      %p73 = por %p71, %p72
      %p74 = scmp.ne.s32.totalorder %s66, %s68
      %p75 = scmp.eq.s32.totalorder %s21, 5
      %p76 = por %p74, %p75
      %p77 = scmp.ne.s32.totalorder %s68, %s69
      %p78 = scmp.eq.s32.totalorder %s21, 0
      %p79 = por %p77, %p78
      %p80 = scmp.ne.s32.totalorder %s68, %s69
      %p81 = scmp.eq.s32.totalorder %s22, 5
      %p82 = por %p80, %p81
      %p84 = scmp.ne.s32.totalorder %s69, %s83
      %p85 = scmp.eq.s32.totalorder %s22, 0
      %p86 = por %p84, %p85
      %p87 = scmp.eq.s32.totalorder %s23, 0
      %s88 = scalar_select %p87, 0, %s24
      %p89 = scmp.eq.s32.totalorder %s35, 0
      %s90 = scalar_select %p89, 0, %s31
      %s91 = ssub.s32 %s88, %s90
      %p92 = scmp.eq.s32.totalorder %s91, 0
      %s94 = sadd.s32 %s93, 1
      %s95 = scalar_select %p92, %s93, %s94
      %p98 = pneg %p92
      %p99 = scmp.eq.s32.totalorder %s16, 5
      %p100 = por %p98, %p99
      %p101 = scmp.ne.s32.totalorder %s93, %s96
      %p102 = scmp.eq.s32.totalorder %s16, 0
      %p103 = por %p101, %p102
      %p104 = scmp.ne.s32.totalorder %s93, %s96
      %p105 = scmp.eq.s32.totalorder %s21, 5
      %p106 = por %p104, %p105
      %p107 = scmp.ne.s32.totalorder %s96, %s97
      %p108 = scmp.eq.s32.totalorder %s21, 0
      %p109 = por %p107, %p108
      %p110 = scmp.ne.s32.totalorder %s96, %s97
      %p111 = scmp.eq.s32.totalorder %s22, 5
      %p112 = por %p110, %p111
      %p114 = scmp.ne.s32.totalorder %s97, %s113
      %p115 = scmp.eq.s32.totalorder %s22, 0
      %p116 = por %p114, %p115
      %p117 = scmp.eq.s32.totalorder %s23, 2
      %s118 = scalar_select %p117, %s24, 0
      %p119 = scmp.eq.s32.totalorder %s35, 2
      %s120 = scalar_select %p119, %s31, 0
      %s121 = ssub.s32 %s118, %s120
      %p122 = scmp.eq.s32.totalorder %s121, 0
      %s124 = sadd.s32 %s123, 1
      %s125 = scalar_select %p122, %s123, %s124
      %p128 = pneg %p122
      %p129 = scmp.eq.s32.totalorder %s16, 5
      %p130 = por %p128, %p129
      %p131 = scmp.ne.s32.totalorder %s123, %s126
      %p132 = scmp.eq.s32.totalorder %s16, 0
      %p133 = por %p131, %p132
      %p134 = scmp.ne.s32.totalorder %s123, %s126
      %p135 = scmp.eq.s32.totalorder %s21, 5
      %p136 = por %p134, %p135
      %p137 = scmp.ne.s32.totalorder %s126, %s127
      %p138 = scmp.eq.s32.totalorder %s21, 0
      %p139 = por %p137, %p138
      %p140 = scmp.ne.s32.totalorder %s126, %s127
      %p141 = scmp.eq.s32.totalorder %s22, 5
      %p142 = por %p140, %p141
      %p144 = scmp.ne.s32.totalorder %s127, %s143
      %p145 = scmp.eq.s32.totalorder %s22, 0
      %p146 = por %p144, %p145
      %p147 = scmp.le.s32.totalorder 1, %s16
      %p148 = scmp.lt.s32.totalorder %s16, 7
      %p149 = pnand %p147, %p148
      %p150 = pneg %p149
      // Predicated region
      $region9: #{tpu_custom_call.1} parent=5 // pred_check
        _
      $region10: #{tpu_custom_call.1} parent=5 // pred_check_branch
        %152 = sbr.rel (%p149) target = $region12
      $region11: #{tpu_custom_call.1} parent=5 // pred_region
        %s153 = ssub.s32 %s16, 1
        // Predicated region
        $region13: #{tpu_custom_call.1} parent=11 // pred_check
          %p154 = pneg %p79
        $region14: #{tpu_custom_call.1} parent=11 // pred_check_branch
          %156 = sbr.rel (%p154) target = $region16
        $region15: #{tpu_custom_call.1} parent=11 // pred_region
          %s158 = ssub.s32 256, 256
          %159 = vsyncadd [#allocation10], %s158
          %s160 = sshll.u32 [#allocation9], 4
          %s161 = int_to_ptr.vmem [resolvable:$true] %s160
          %166 = dma.hbm_to_vmem [thread:$0]  %s1, 256, %s161, [#allocation10], 128, 128, 8
        $region16: #{tpu_custom_call.1} parent=11 // pred_fallthru
          _
      $region12: #{tpu_custom_call.1} parent=5 // pred_fallthru
        _
      %p167 = scmp.lt.s32.totalorder %s16, 6
      // Predicated region
      $region17: #{tpu_custom_call.1} parent=5 // pred_check
        %p168 = pneg %p167
      $region18: #{tpu_custom_call.1} parent=5 // pred_check_branch
        %170 = sbr.rel (%p168) target = $region20
      $region19: #{tpu_custom_call.1} parent=5 // pred_region
        // Predicated region
        $region21: #{tpu_custom_call.1} parent=19 // pred_check
          %p171 = pneg %p52
        $region22: #{tpu_custom_call.1} parent=19 // pred_check_branch
          %173 = sbr.rel (%p171) target = $region24
        $region23: #{tpu_custom_call.1} parent=19 // pred_region
          %s174 = sand.u32 %s16, 1
          %s175 = scalar_lea.sflag [#allocation7], %s174
          %s176 = sand.u32 %s42, 1
          %s177 = smul.addr %s176, 8
          %s178 = scalar_lea.vmem [#allocation6], %s177
          %p179 = scmp.eq.s32.totalorder %s23, 0
          %s180 = scalar_select %p179, %s24, 1
          %s182 = ssub.s32 128, 128
          %183 = vsyncadd %s175, %s182
          %s184 = smul.addr %s180, 128
          %s185 = scalar_lea.hbm %s0, %s184
          %s187 = sshll.u32 %s178, 4
          %s188 = int_to_ptr.vmem [resolvable:$true] %s187
          %190 = dma.hbm_to_vmem [thread:$0]  %s185, 128, %s188, %s175
        $region24: #{tpu_custom_call.1} parent=19 // pred_fallthru
          _
        // Predicated region
        $region25: #{tpu_custom_call.1} parent=19 // pred_check
          %p191 = pneg %p103
        $region26: #{tpu_custom_call.1} parent=19 // pred_check_branch
          %193 = sbr.rel (%p191) target = $region28
        $region27: #{tpu_custom_call.1} parent=19 // pred_region
          %s194 = sand.u32 %s16, 1
          %s195 = scalar_lea.sflag [#allocation7], %s194
          %s196 = sand.u32 %s93, 1
          %s197 = smul.addr %s196, 4
          %s198 = scalar_lea.vmem [#allocation11], %s197
          %p199 = scmp.eq.s32.totalorder %s23, 0
          %s200 = scalar_select %p199, 0, %s24
          %s202 = ssub.s32 64, 64
          %203 = vsyncadd %s195, %s202
          %s204 = smul.addr %s200, 64
          %s205 = scalar_lea.hbm %s2, %s204
          %s207 = sshll.u32 %s198, 4
          %s208 = int_to_ptr.vmem [resolvable:$true] %s207
          %210 = dma.hbm_to_vmem [thread:$0]  %s205, 64, %s208, %s195
        $region28: #{tpu_custom_call.1} parent=19 // pred_fallthru
          _
      $region20: #{tpu_custom_call.1} parent=5 // pred_fallthru
        _
      %p211 = scmp.le.s32.totalorder 1, %s16
      %p212 = scmp.lt.s32.totalorder %s16, 7
      %p213 = pnand %p211, %p212
      %p214 = pneg %p213
      // Predicated region
      $region29: #{tpu_custom_call.1} parent=5 // pred_check
        _
      $region30: #{tpu_custom_call.1} parent=5 // pred_check_branch
        %216 = sbr.rel (%p213) target = $region32
      $region31: #{tpu_custom_call.1} parent=5 // pred_region
        %s217 = ssub.s32 %s16, 1
        %s218 = sand.u32 %s21, 1
        %s219 = scalar_lea.sflag [#allocation7], %s218
        %s220 = sand.u32 %s45, 1
        %s221 = smul.addr %s220, 8
        %s222 = scalar_lea.vmem [#allocation6], %s221
        // Predicated region
        $region33: #{tpu_custom_call.1} parent=31 // pred_check
          %p223 = pneg %p58
        $region34: #{tpu_custom_call.1} parent=31 // pred_check_branch
          %225 = sbr.rel (%p223) target = $region36
        $region35: #{tpu_custom_call.1} parent=31 // pred_region
          %226 = dma.done %s219, 128
        $region36: #{tpu_custom_call.1} parent=31 // pred_fallthru
          _
        // Predicated region
        $region37: #{tpu_custom_call.1} parent=31 // pred_check
          %p227 = pneg %p79
        $region38: #{tpu_custom_call.1} parent=31 // pred_check_branch
          %229 = sbr.rel (%p227) target = $region40
        $region39: #{tpu_custom_call.1} parent=31 // pred_region
          %230 = dma.done [#allocation10], 256
        $region40: #{tpu_custom_call.1} parent=31 // pred_fallthru
          _
        %s231 = sand.u32 %s21, 1
        %s232 = scalar_lea.sflag [#allocation7], %s231
        %s233 = sand.u32 %s96, 1
        %s234 = smul.addr %s233, 4
        %s235 = scalar_lea.vmem [#allocation11], %s234
        // Predicated region
        $region41: #{tpu_custom_call.1} parent=31 // pred_check
          %p236 = pneg %p109
        $region42: #{tpu_custom_call.1} parent=31 // pred_check_branch
          %238 = sbr.rel (%p236) target = $region44
        $region43: #{tpu_custom_call.1} parent=31 // pred_region
          %239 = dma.done %s232, 64
        $region44: #{tpu_custom_call.1} parent=31 // pred_fallthru
          _
        %s240 = sand.u32 %s21, 1
        %s241 = scalar_lea.sflag [#allocation7], %s240
        %s242 = sand.u32 %s45, 1
        %s243 = smul.addr %s242, 8
        %s244 = scalar_lea.vmem [#allocation6], %s243
        %p245 = pneg %p58
        %p246 = pneg %p55
        %p247 = pneg %p79
        %p248 = pneg %p76
        %s249 = sand.u32 %s21, 1
        %s250 = scalar_lea.sflag [#allocation7], %s249
        %s251 = sand.u32 %s96, 1
        %s252 = smul.addr %s251, 4
        %s253 = scalar_lea.vmem [#allocation11], %s252
        %p254 = pneg %p109
        %p255 = pneg %p106
        %p256 = pneg %p139
        %p257 = pneg %p136
        %s258 = sand.u32 %s126, 1
        %s259 = scalar_lea.sflag [#allocation8], %s258
        %s260 = sand.u32 %s126, 1
        %s261 = smul.addr %s260, 8
        %s262 = scalar_lea.vmem [#allocation12], %s261
        %p263 = scmp.eq.s32.totalorder %s25, 0
        %s264 = scalar_select %p263, %s26, 1
        %p265 = scmp.eq.s32.totalorder %s25, 0
        %s266 = scalar_select %p265, 0, %s26
        %p267 = scmp.eq.s32.totalorder %s25, 2
        %s268 = scalar_select %p267, %s26, 0
        %s269 = smul.u32 %s26, 8
        %p270 = scmp.eq.s32.totalorder %s25, 0
        // Predicated region
        $region45: #{tpu_custom_call.1} parent=31 // pred_check
          %p271 = pneg %p270
        $region46: #{tpu_custom_call.1} parent=31 // pred_check_branch
          %273 = sbr.rel (%p271) target = $region48
        $region47: #{tpu_custom_call.1} parent=31 // pred_region
          %v274 = vld [vmem:[%s222] sm:$0xff]
          %v275 = vld [vmem:[#allocation9] sm:$0xff]
          %v276 = vld [vmem:[#allocation9 + $0x8] sm:$0xff]
          %vm277 = vcmask 130048
          %v279 = vsel %vm277, %v274, 0
          %281 = vmatprep.subr.mxu0 0.0
          %282 = vmatpush1.msra.mxu0 0.0
          %283 = vmatprep.subr.mxu0 0.0
          %284 = vmatpush1.msra.mxu0 0.0
          %285 = vmatprep.subr.mxu0 0.0
          %286 = vmatpush1.msra.mxu0 0.0
          %287 = vmatprep.subr.mxu0 0.0
          %288 = vmatpush1.msra.mxu0 0.0
          %289 = vmatprep.subr.mxu0 0.0
          %290 = vmatpush1.msra.mxu0 0.0
          %291 = vmatprep.subr.mxu0 0.0
          %292 = vmatpush1.msra.mxu0 0.0
          %293 = vmatprep.subr.mxu0 0.0
          %294 = vmatpush1.msra.mxu0 0.0
          %295 = vmatprep.subr.mxu0 0.0
          %296 = vmatpush1.msra.mxu0 0.0
          %297 = vmatprep.subr.mxu0 0.0
          %298 = vmatpush1.msra.mxu0 0.0
          %299 = vmatprep.subr.mxu0 0.0
          %300 = vmatpush1.msra.mxu0 0.0
          %301 = vmatprep.subr.mxu0 0.0
          %302 = vmatpush1.msra.mxu0 0.0
          %303 = vmatprep.subr.mxu0 0.0
          %304 = vmatpush1.msra.mxu0 0.0
          %305 = vmatprep.subr.mxu0 0.0
          %306 = vmatpush1.msra.mxu0 0.0
          %307 = vmatprep.subr.mxu0 0.0
          %308 = vmatpush1.msra.mxu0 0.0
          %309 = vmatprep.subr.mxu0 0.0
          %310 = vmatpush1.msra.mxu0 %v276
          %311 = vmatprep.subr.mxu0 0.0
          %312 = vmatpush1.msra.mxu0 %v275
          %313 = vmatprep.subr.mxu0 0.0
          %314 = vmatpush2.msra.mxu0 0.0
          %315 = vmatprep.subr.mxu0 0.0
          %316 = vmatpush2.msra.mxu0 0.0
          %317 = vmatprep.subr.mxu0 0.0
          %318 = vmatpush2.msra.mxu0 0.0
          %319 = vmatprep.subr.mxu0 0.0
          %320 = vmatpush2.msra.mxu0 0.0
          %321 = vmatprep.subr.mxu0 0.0
          %322 = vmatpush2.msra.mxu0 0.0
          %323 = vmatprep.subr.mxu0 0.0
          %324 = vmatpush2.msra.mxu0 0.0
          %325 = vmatprep.subr.mxu0 0.0
          %326 = vmatpush2.msra.mxu0 0.0
          %327 = vmatprep.subr.mxu0 0.0
          %328 = vmatpush2.msra.mxu0 0.0
          %329 = vmatprep.subr.mxu0 0.0
          %330 = vmatpush2.msra.mxu0 0.0
          %331 = vmatprep.subr.mxu0 0.0
          %332 = vmatpush2.msra.mxu0 0.0
          %333 = vmatprep.subr.mxu0 0.0
          %334 = vmatpush2.msra.mxu0 0.0
          %335 = vmatprep.subr.mxu0 0.0
          %336 = vmatpush2.msra.mxu0 0.0
          %337 = vmatprep.subr.mxu0 0.0
          %338 = vmatpush2.msra.mxu0 0.0
          %339 = vmatprep.subr.mxu0 0.0
          %340 = vmatpush2.msra.mxu0 0.0
          %341 = vmatprep.subr.mxu0 0.0
          %342 = vmatpush2.msra.mxu0 0.0
          %343 = vmatprep.subr.mxu0 0.0
          %344 = vmatpush2.msra.mxu0 0.0
          %345 = vmatprep.mubr.f32.mxu0 0.0
          %346 = vmatmul.mubr.f32.gmra.mxu0 %v279
          %v347 = vpop.f32.mrf.mxu0
          %v348 = vadd.f32 0.0, %v347
          %v349 = vpop.f32.mrf.mxu0
          %350 = vdwg.mxu0
          %s351 = scalar_lea.vmem [#allocation2], %s269
          %352 = vst [vmem:[%s351] sm:$0xff] %v348
          %s353 = scalar_lea.vmem [#allocation3], %s269
          %354 = vst [vmem:[%s353] sm:$0xff] %v348
          %v355 = vmul.f32 %v348, %v348
          %v356 = vrot.slane %v355, 4
          %v357 = vadd.f32 %v355, %v356
          %v358 = vrot.slane %v357, 2
          %v359 = vadd.f32 %v357, %v358
          %v360 = vrot.slane %v359, 1
          %v361 = vadd.f32 %v359, %v360
          %p362 = scmp.eq.s32.totalorder %s26, 0
          // Predicated region
          $region49: #{tpu_custom_call.1} parent=47 // pred_check
            %p363 = pneg %p362
          $region50: #{tpu_custom_call.1} parent=47 // pred_check_branch
            %365 = sbr.rel (%p363) target = $region52
          $region51: #{tpu_custom_call.1} parent=47 // pred_region
            %366 = vst [vmem:[#allocation5] sm:$0x1] %v361
          $region52: #{tpu_custom_call.1} parent=47 // pred_fallthru
            _
          %p367 = scmp.gt.s32.totalorder %s26, 0
          // Predicated region
          $region53: #{tpu_custom_call.1} parent=47 // pred_check
            %p368 = pneg %p367
          $region54: #{tpu_custom_call.1} parent=47 // pred_check_branch
            %370 = sbr.rel (%p368) target = $region56
          $region55: #{tpu_custom_call.1} parent=47 // pred_region
            %v371 = vld [vmem:[#allocation5] sm:$0x1]
            %v372 = vadd.f32 %v371, %v361
            %373 = vst [vmem:[#allocation5] sm:$0x1] %v372
          $region56: #{tpu_custom_call.1} parent=47 // pred_fallthru
            _
        $region48: #{tpu_custom_call.1} parent=31 // pred_fallthru
          _
        %p374 = scmp.lt.s32.totalorder %s25, 0
        %s375 = ssub.s32 0, %s25
        %s376 = scalar_select %p374, %s375, %s25
        %s377 = sand.u32 %s376, 1
        %s378 = ssub.s32 0, %s377
        %s379 = scalar_select %p374, %s378, %s377
        %p380 = scmp.ne.s32.totalorder %s379, 0
        %p381 = scmp.lt.s32.totalorder %s379, 0
        %p382 = pnand %p381, %p380
        %p383 = pneg %p382
        %s384 = sadd.s32 %s379, 2
        %s385 = scalar_select %p383, %s384, %s379
        %p386 = scmp.ge.s32.totalorder %s25, 1
        %p387 = scmp.eq.s32.totalorder %s385, 1
        %p388 = pnand %p386, %p387
        %p389 = pneg %p388
        // Predicated region
        $region57: #{tpu_custom_call.1} parent=31 // pred_check
          _
        $region58: #{tpu_custom_call.1} parent=31 // pred_check_branch
          %391 = sbr.rel (%p388) target = $region60
        $region59: #{tpu_custom_call.1} parent=31 // pred_region
          %v392 = vld [vmem:[%s235] sm:$0xf]
          %v393 = vunpack.c.l.bf16 %v392
          %vm394 = vcmask 130048
          %v395 = vsel %vm394, %v393, 0.0
          %396 = vadd.xlane.f32.xlu0 %v395
          %v397 = vpop.xlane.xlu0 %396
          %v398 = vadd.f32 %v397, 1.0
          %v399 = vld [vmem:[#allocation3] sm:$0xff]
          %v400 = vld [vmem:[#allocation3 + $0x8] sm:$0xff]
          %s401 = scalar_lea.vmem [#allocation3], %s269
          %v402 = vld [vmem:[%s401] sm:$0xff]
          %s403 = scalar_lea.vmem [#allocation2], %s269
          %v404 = vld [vmem:[%s403] sm:$0xff]
          %v405 = vmul.f32 %v402, 1.1
          %v406 = vrcp.pop %v398
          %v407 = vmul.f32 1.0, %v406
          %v409 = vsel %vm394, %v393, 0
          %411 = vmatprep.subr.mxu0 0.0
          %412 = vmatpush1.msra.mxu0 0.0
          %413 = vmatprep.subr.mxu0 0.0
          %414 = vmatpush1.msra.mxu0 0.0
          %415 = vmatprep.subr.mxu0 0.0
          %416 = vmatpush1.msra.mxu0 0.0
          %417 = vmatprep.subr.mxu0 0.0
          %418 = vmatpush1.msra.mxu0 0.0
          %419 = vmatprep.subr.mxu0 0.0
          %420 = vmatpush1.msra.mxu0 0.0
          %421 = vmatprep.subr.mxu0 0.0
          %422 = vmatpush1.msra.mxu0 0.0
          %423 = vmatprep.subr.mxu0 0.0
          %424 = vmatpush1.msra.mxu0 0.0
          %425 = vmatprep.subr.mxu0 0.0
          %426 = vmatpush1.msra.mxu0 0.0
          %427 = vmatprep.subr.mxu0 0.0
          %428 = vmatpush1.msra.mxu0 0.0
          %429 = vmatprep.subr.mxu0 0.0
          %430 = vmatpush1.msra.mxu0 0.0
          %431 = vmatprep.subr.mxu0 0.0
          %432 = vmatpush1.msra.mxu0 0.0
          %433 = vmatprep.subr.mxu0 0.0
          %434 = vmatpush1.msra.mxu0 0.0
          %435 = vmatprep.subr.mxu0 0.0
          %436 = vmatpush1.msra.mxu0 0.0
          %437 = vmatprep.subr.mxu0 0.0
          %438 = vmatpush1.msra.mxu0 0.0
          %439 = vmatprep.subr.mxu0 0.0
          %440 = vmatpush1.msra.mxu0 %v400
          %441 = vmatprep.subr.mxu0 0.0
          %442 = vmatpush1.msra.mxu0 %v399
          %443 = vmatprep.subr.mxu0 0.0
          %444 = vmatpush2.msra.mxu0 0.0
          %445 = vmatprep.subr.mxu0 0.0
          %446 = vmatpush2.msra.mxu0 0.0
          %447 = vmatprep.subr.mxu0 0.0
          %448 = vmatpush2.msra.mxu0 0.0
          %449 = vmatprep.subr.mxu0 0.0
          %450 = vmatpush2.msra.mxu0 0.0
          %451 = vmatprep.subr.mxu0 0.0
          %452 = vmatpush2.msra.mxu0 0.0
          %453 = vmatprep.subr.mxu0 0.0
          %454 = vmatpush2.msra.mxu0 0.0
          %455 = vmatprep.subr.mxu0 0.0
          %456 = vmatpush2.msra.mxu0 0.0
          %457 = vmatprep.subr.mxu0 0.0
          %458 = vmatpush2.msra.mxu0 0.0
          %459 = vmatprep.subr.mxu0 0.0
          %460 = vmatpush2.msra.mxu0 0.0
          %461 = vmatprep.subr.mxu0 0.0
          %462 = vmatpush2.msra.mxu0 0.0
          %463 = vmatprep.subr.mxu0 0.0
          %464 = vmatpush2.msra.mxu0 0.0
          %465 = vmatprep.subr.mxu0 0.0
          %466 = vmatpush2.msra.mxu0 0.0
          %467 = vmatprep.subr.mxu0 0.0
          %468 = vmatpush2.msra.mxu0 0.0
          %469 = vmatprep.subr.mxu0 0.0
          %470 = vmatpush2.msra.mxu0 0.0
          %471 = vmatprep.subr.mxu0 0.0
          %472 = vmatpush2.msra.mxu0 0.0
          %473 = vmatprep.subr.mxu0 0.0
          %474 = vmatpush2.msra.mxu0 0.0
          %475 = vmatprep.mubr.f32.mxu0 0.0
          %476 = vmatmul.mubr.f32.gmra.mxu0 %v409
          %v477 = vpop.f32.mrf.mxu0
          %v478 = vadd.f32 %v402, %v477
          %v479 = vpop.f32.mrf.mxu0
          %480 = vdwg.mxu0
          %v481 = vmul.f32 %v407, %v478
          %v482 = vsub.f32 %v405, %v481
          %v483 = vld [vmem:[#allocation5] sm:$0x1]
          %v484 = vrsqrt.pop %v483
          %v485 = vmul.f32 %v483, %v484
          %vm486 = vcmp.eq.f32.partialorder %v483, inf
          %v487 = vsel %vm486, %v483, %v485
          %vm488 = vcmp.eq.f32.partialorder %v483, 0.0
          %v489 = vand.u32 %v483, 2147483648
          %v490 = vsel %vm488, %v489, %v487
          %v491 = vadd.f32 %v398, 1e-06
          %v492 = vrcp.pop %v491
          %v493 = vmul.f32 -0.05, %v492
          %v494 = vmul.f32 %v493, %v402
          %v496 = vlaneseq
          %v497 = vshrl.u32 %v496, 7
          %v498 = vsub.s32 0, %v497
          %v499 = vrot.slane %v490, %v498
          %v501 = vmul.f32 %v494, %v499
          %502 = vadd.xlane.f32.xlu0 %v501
          %v503 = vpop.xlane.xlu0 %502
          %v504 = vmul.f32 %v503, 0.96875
          %v505 = vmul.f32 %v504, %v499
          %v506 = vadd.f32 %v404, %v402
          %v507 = vsub.f32 %v506, %v482
          %v508 = vsub.f32 %v507, %v505
          %s509 = scalar_lea.vmem [#allocation4], %s269
          %510 = vst [vmem:[%s509] sm:$0xff] %v508
          %p511 = scmp.eq.s32.totalorder %s25, 2
          // Predicated region
          $region61: #{tpu_custom_call.1} parent=59 // pred_check
            %p512 = pneg %p511
          $region62: #{tpu_custom_call.1} parent=59 // pred_check_branch
            %514 = sbr.rel (%p512) target = $region64
          $region63: #{tpu_custom_call.1} parent=59 // pred_region
            %vm515 = vcmp.gt.f32.partialorder %v508, 0.0
            %v516 = vmul.f32 %v508, 1.442695
            %v517 = vpow.pop %v516
            %v518 = vsub.f32 %v517, 1.0
            %v519 = vsel %vm515, %v508, %v518
            %520 = vst [vmem:[%s262] sm:$0xff] %v519
          $region64: #{tpu_custom_call.1} parent=59 // pred_fallthru
            _
        $region60: #{tpu_custom_call.1} parent=31 // pred_fallthru
          _
        %p521 = scmp.eq.s32.totalorder %s385, 0
        %p522 = pnand %p386, %p521
        %p523 = pneg %p522
        // Predicated region
        $region65: #{tpu_custom_call.1} parent=31 // pred_check
          _
        $region66: #{tpu_custom_call.1} parent=31 // pred_check_branch
          %525 = sbr.rel (%p522) target = $region68
        $region67: #{tpu_custom_call.1} parent=31 // pred_region
          %v526 = vld [vmem:[%s235] sm:$0xf]
          %v527 = vunpack.c.l.bf16 %v526
          %vm528 = vcmask 130048
          %v529 = vsel %vm528, %v527, 0.0
          %530 = vadd.xlane.f32.xlu0 %v529
          %v531 = vpop.xlane.xlu0 %530
          %v532 = vadd.f32 %v531, 1.0
          %v533 = vld [vmem:[#allocation4] sm:$0xff]
          %v534 = vld [vmem:[#allocation4 + $0x8] sm:$0xff]
          %s535 = scalar_lea.vmem [#allocation4], %s269
          %v536 = vld [vmem:[%s535] sm:$0xff]
          %s537 = scalar_lea.vmem [#allocation2], %s269
          %v538 = vld [vmem:[%s537] sm:$0xff]
          %v539 = vmul.f32 %v536, 1.1
          %v540 = vrcp.pop %v532
          %v541 = vmul.f32 1.0, %v540
          %v543 = vsel %vm528, %v527, 0
          %545 = vmatprep.subr.mxu0 0.0
          %546 = vmatpush1.msra.mxu0 0.0
          %547 = vmatprep.subr.mxu0 0.0
          %548 = vmatpush1.msra.mxu0 0.0
          %549 = vmatprep.subr.mxu0 0.0
          %550 = vmatpush1.msra.mxu0 0.0
          %551 = vmatprep.subr.mxu0 0.0
          %552 = vmatpush1.msra.mxu0 0.0
          %553 = vmatprep.subr.mxu0 0.0
          %554 = vmatpush1.msra.mxu0 0.0
          %555 = vmatprep.subr.mxu0 0.0
          %556 = vmatpush1.msra.mxu0 0.0
          %557 = vmatprep.subr.mxu0 0.0
          %558 = vmatpush1.msra.mxu0 0.0
          %559 = vmatprep.subr.mxu0 0.0
          %560 = vmatpush1.msra.mxu0 0.0
          %561 = vmatprep.subr.mxu0 0.0
          %562 = vmatpush1.msra.mxu0 0.0
          %563 = vmatprep.subr.mxu0 0.0
          %564 = vmatpush1.msra.mxu0 0.0
          %565 = vmatprep.subr.mxu0 0.0
          %566 = vmatpush1.msra.mxu0 0.0
          %567 = vmatprep.subr.mxu0 0.0
          %568 = vmatpush1.msra.mxu0 0.0
          %569 = vmatprep.subr.mxu0 0.0
          %570 = vmatpush1.msra.mxu0 0.0
          %571 = vmatprep.subr.mxu0 0.0
          %572 = vmatpush1.msra.mxu0 0.0
          %573 = vmatprep.subr.mxu0 0.0
          %574 = vmatpush1.msra.mxu0 %v534
          %575 = vmatprep.subr.mxu0 0.0
          %576 = vmatpush1.msra.mxu0 %v533
          %577 = vmatprep.subr.mxu0 0.0
          %578 = vmatpush2.msra.mxu0 0.0
          %579 = vmatprep.subr.mxu0 0.0
          %580 = vmatpush2.msra.mxu0 0.0
          %581 = vmatprep.subr.mxu0 0.0
          %582 = vmatpush2.msra.mxu0 0.0
          %583 = vmatprep.subr.mxu0 0.0
          %584 = vmatpush2.msra.mxu0 0.0
          %585 = vmatprep.subr.mxu0 0.0
          %586 = vmatpush2.msra.mxu0 0.0
          %587 = vmatprep.subr.mxu0 0.0
          %588 = vmatpush2.msra.mxu0 0.0
          %589 = vmatprep.subr.mxu0 0.0
          %590 = vmatpush2.msra.mxu0 0.0
          %591 = vmatprep.subr.mxu0 0.0
          %592 = vmatpush2.msra.mxu0 0.0
          %593 = vmatprep.subr.mxu0 0.0
          %594 = vmatpush2.msra.mxu0 0.0
          %595 = vmatprep.subr.mxu0 0.0
          %596 = vmatpush2.msra.mxu0 0.0
          %597 = vmatprep.subr.mxu0 0.0
          %598 = vmatpush2.msra.mxu0 0.0
          %599 = vmatprep.subr.mxu0 0.0
          %600 = vmatpush2.msra.mxu0 0.0
          %601 = vmatprep.subr.mxu0 0.0
          %602 = vmatpush2.msra.mxu0 0.0
          %603 = vmatprep.subr.mxu0 0.0
          %604 = vmatpush2.msra.mxu0 0.0
          %605 = vmatprep.subr.mxu0 0.0
          %606 = vmatpush2.msra.mxu0 0.0
          %607 = vmatprep.subr.mxu0 0.0
          %608 = vmatpush2.msra.mxu0 0.0
          %609 = vmatprep.mubr.f32.mxu0 0.0
          %610 = vmatmul.mubr.f32.gmra.mxu0 %v543
          %v611 = vpop.f32.mrf.mxu0
          %v612 = vadd.f32 %v536, %v611
          %v613 = vpop.f32.mrf.mxu0
          %614 = vdwg.mxu0
          %v615 = vmul.f32 %v541, %v612
          %v616 = vsub.f32 %v539, %v615
          %v617 = vld [vmem:[#allocation5] sm:$0x1]
          %v618 = vrsqrt.pop %v617
          %v619 = vmul.f32 %v617, %v618
          %vm620 = vcmp.eq.f32.partialorder %v617, inf
          %v621 = vsel %vm620, %v617, %v619
          %vm622 = vcmp.eq.f32.partialorder %v617, 0.0
          %v623 = vand.u32 %v617, 2147483648
          %v624 = vsel %vm622, %v623, %v621
          %v625 = vadd.f32 %v532, 1e-06
          %v626 = vrcp.pop %v625
          %v627 = vmul.f32 -0.05, %v626
          %v628 = vmul.f32 %v627, %v536
          %v630 = vlaneseq
          %v631 = vshrl.u32 %v630, 7
          %v632 = vsub.s32 0, %v631
          %v633 = vrot.slane %v624, %v632
          %v635 = vmul.f32 %v628, %v633
          %636 = vadd.xlane.f32.xlu0 %v635
          %v637 = vpop.xlane.xlu0 %636
          %v638 = vmul.f32 %v637, 0.96875
          %v639 = vmul.f32 %v638, %v633
          %v640 = vadd.f32 %v538, %v536
          %v641 = vsub.f32 %v640, %v616
          %v642 = vsub.f32 %v641, %v639
          %s643 = scalar_lea.vmem [#allocation3], %s269
          %644 = vst [vmem:[%s643] sm:$0xff] %v642
          %p645 = scmp.eq.s32.totalorder %s25, 2
          // Predicated region
          $region69: #{tpu_custom_call.1} parent=67 // pred_check
            %p646 = pneg %p645
          $region70: #{tpu_custom_call.1} parent=67 // pred_check_branch
            %648 = sbr.rel (%p646) target = $region72
          $region71: #{tpu_custom_call.1} parent=67 // pred_region
            %vm649 = vcmp.gt.f32.partialorder %v642, 0.0
            %v650 = vmul.f32 %v642, 1.442695
            %v651 = vpow.pop %v650
            %v652 = vsub.f32 %v651, 1.0
            %v653 = vsel %vm649, %v642, %v652
            %654 = vst [vmem:[%s262] sm:$0xff] %v653
          $region72: #{tpu_custom_call.1} parent=67 // pred_fallthru
            _
        $region68: #{tpu_custom_call.1} parent=31 // pred_fallthru
          _
        %s655 = sand.u32 %s126, 1
        %s656 = scalar_lea.sflag [#allocation8], %s655
        %s657 = sand.u32 %s126, 1
        %s658 = smul.addr %s657, 8
        %s659 = scalar_lea.vmem [#allocation12], %s658
        // Predicated region
        $region73: #{tpu_custom_call.1} parent=31 // pred_check
          %p660 = pneg %p136
        $region74: #{tpu_custom_call.1} parent=31 // pred_check_branch
          %662 = sbr.rel (%p660) target = $region76
        $region75: #{tpu_custom_call.1} parent=31 // pred_region
          %p663 = scmp.eq.s32.totalorder %s25, 2
          %s664 = scalar_select %p663, %s26, 0
          %s666 = ssub.s32 128, 128
          %667 = vsyncadd %s656, %s666
          %s668 = smul.addr %s664, 128
          %s669 = scalar_lea.hbm %s3, %s668
          %s671 = sshll.u32 %s659, 4
          %s672 = int_to_ptr.vmem [resolvable:$true] %s671
          %674 = dma.vmem_to_hbm [thread:$0]  %s672, 128, %s669, %s656
        $region76: #{tpu_custom_call.1} parent=31 // pred_fallthru
          _
      $region32: #{tpu_custom_call.1} parent=5 // pred_fallthru
        _
      %p675 = scmp.le.s32.totalorder 2, %s16
      // Predicated region
      $region77: #{tpu_custom_call.1} parent=5 // pred_check
        %p676 = pneg %p675
      $region78: #{tpu_custom_call.1} parent=5 // pred_check_branch
        %678 = sbr.rel (%p676) target = $region80
      $region79: #{tpu_custom_call.1} parent=5 // pred_region
        %s679 = ssub.s32 %s16, 2
        // Predicated region
        $region81: #{tpu_custom_call.1} parent=79 // pred_check
          %p680 = pneg %p142
        $region82: #{tpu_custom_call.1} parent=79 // pred_check_branch
          %682 = sbr.rel (%p680) target = $region84
        $region83: #{tpu_custom_call.1} parent=79 // pred_region
          %s683 = sand.u32 %s127, 1
          %s684 = scalar_lea.sflag [#allocation8], %s683
          %s685 = sand.u32 %s127, 1
          %s686 = smul.addr %s685, 8
          %s687 = scalar_lea.vmem [#allocation12], %s686
          %688 = dma.done %s684, 128
        $region84: #{tpu_custom_call.1} parent=79 // pred_fallthru
          _
      $region80: #{tpu_custom_call.1} parent=5 // pred_fallthru
        _
    $region6: #{tpu_custom_call.1} parent=1 // loop_footer
      %s20 = sadd.s32 1, %s16
    $region7: #{tpu_custom_call.1} parent=1 // loop_footer_branch
      %15 = sbr.rel target = $region3
    $region8: #{tpu_custom_call.1} parent=1 // loop_exit
      _
    %689 = vsyncpa [#allocation7], 1
    %s690 = scalar_lea.sflag [#allocation7], 1
    %691 = vsyncpa %s690, 1
    %692 = vsyncpa [#allocation10], 1
    %693 = vsyncpa [#allocation8], 1
    %s694 = scalar_lea.sflag [#allocation8], 1
    %695 = vsyncpa %s694, 1

</llo_original>
